<compile_context>
chip_gen: v7x
topology: tpu7x:2x2x1
jax: 0.10.0
libtpu: 0.0.40
codegen_flags: <defaults>
</compile_context>

<pallas_src>
import functools

import jax
import jax.numpy as jnp
from jax import lax
from jax.experimental import pallas as pl
from jax.experimental.pallas import tpu as pltpu

_EPS = 1e-7


def _round_up(v, m):
    return ((v + m - 1) // m) * m


# ---------------------------------------------------------------------------
# Glue: framing + windowed-DFT matrix construction (plain JAX).
# ---------------------------------------------------------------------------
def _hann_window(win_length):
    # torch.hann_window default (periodic=True).
    n = jnp.arange(win_length, dtype=jnp.float32)
    return 0.5 - 0.5 * jnp.cos(2.0 * jnp.pi * n / win_length)


def _padded_window(fft_size, win_length):
    # torch.stft centers the window inside n_fft.
    w = _hann_window(win_length)
    left = (fft_size - win_length) // 2
    return jnp.pad(w, (left, fft_size - win_length - left)).astype(jnp.float32)


def _windowed_dft_rhs(fft_size, win_length):
    """(n_fft, n_fft) DFT matrix with the window folded in; columns packed
    lane-dense as [cos k=0..h-1 | cos k=h (Nyquist) | sin k=1..h-1], h=n_fft//2."""
    half = fft_size // 2
    w = _padded_window(fft_size, win_length)[:, None]               # (n_fft, 1)
    n = jnp.arange(fft_size, dtype=jnp.float32)[:, None]
    k_cos = jnp.arange(half, dtype=jnp.float32)[None, :]
    cos_lo = jnp.cos(2.0 * jnp.pi * n * k_cos / fft_size)           # Re bins 0..h-1
    nyq = jnp.cos(jnp.pi * n)                                       # Re bin h
    k_sin = jnp.arange(1, half, dtype=jnp.float32)[None, :]
    sin_hi = jnp.sin(2.0 * jnp.pi * n * k_sin / fft_size)           # Im bins 1..h-1
    rhs = jnp.concatenate([cos_lo, nyq, sin_hi], axis=1)            # (n_fft, n_fft)
    return (w * rhs).astype(jnp.float32)


def _frame_signal(x, fft_size, hop_size):
    """torch.stft(center=True, pad_mode='reflect') framing; keeps x's dtype."""
    # TODO(synk): for long signals, frame in-kernel from the reflect-padded
    # signal to avoid the (fft/hop)x HBM inflation of the pre-framed array.
    B, T = x.shape
    pad = fft_size // 2
    xp = jnp.pad(x, ((0, 0), (pad, pad)), mode="reflect")
    n_frames = 1 + (T + 2 * pad - fft_size) // hop_size
    idx = (jnp.arange(n_frames)[:, None] * hop_size
           + jnp.arange(fft_size)[None, :])
    return xp[:, idx]                                               # (B, n_frames, n_fft)


# ---------------------------------------------------------------------------
# Pallas kernel: one stacked [x-rows ; y-rows] block -> per-block loss partials.
# ---------------------------------------------------------------------------
def _stft_loss_kernel(xy_ref, rhs_ref, out_ref, *, eps):
    two_r, n_fft = xy_ref.shape
    rows = two_r // 2          # first R rows = x frames, next R rows = y frames
    half = n_fft // 2

    # ONE MXU matmul for both signals (shared weight pushes / result drain):
    #   z[:, :half]   = Re bins 0..h-1
    #   z[:, half]    = Re bin h (Nyquist)
    #   z[:, half+1:] = Im bins 1..h-1       (Im at bins 0 and h is 0)
    z = jnp.dot(xy_ref[...], rhs_ref[...], preferred_element_type=jnp.float32)
    zx = z[:rows, :]
    zy = z[rows:, :]

    lane = lax.broadcasted_iota(jnp.int32, (rows, half), 1)
    is_lane0 = lane == 0

    def clamped_powers(zz):
        zsq = zz * zz
        hi = zsq[:, half:]                               # [nyq^2, im_1^2 .. im_{h-1}^2]
        p_lo = jnp.maximum(zsq[:, :half] + jnp.where(is_lane0, 0.0, hi), eps)
        p_ny = jnp.maximum(zsq[:, half:half + 1], eps)   # (rows, 1) Nyquist bin
        return p_lo, p_ny

    xp_lo, xp_ny = clamped_powers(zx)
    yp_lo, yp_ny = clamped_powers(zy)

    # Spectral-convergence numerator (only place a sqrt is needed).
    d_lo = jnp.sqrt(yp_lo) - jnp.sqrt(xp_lo)
    d_ny = jnp.sqrt(yp_ny) - jnp.sqrt(xp_ny)
    t_num = d_lo * d_lo + jnp.where(is_lane0, d_ny * d_ny, 0.0)

    # Denominator: sum of y_mag^2 == clamp(pow_y).  Zero-padded rows contribute
    # exactly (half+1)*eps each; that constant is subtracted once in the JAX
    # epilogue instead of masking rows here.
    t_den = yp_lo + jnp.where(is_lane0, yp_ny, 0.0)

    # |log y_mag - log x_mag| == 0.5 * |log pow_y - log pow_x| (0.5 applied in
    # the JAX epilogue).  Padded rows contribute exactly 0 (x == y == 0 there).
    t_log = (jnp.abs(jnp.log(yp_lo) - jnp.log(xp_lo))
             + jnp.where(is_lane0, jnp.abs(jnp.log(yp_ny) - jnp.log(xp_ny)), 0.0))

    # Three direct stores into the output block (no concatenate/reshape copy).
    out_ref[:, 0, :] = jnp.sum(t_num, axis=0, keepdims=True)
    out_ref[:, 1, :] = jnp.sum(t_den, axis=0, keepdims=True)
    out_ref[:, 2, :] = jnp.sum(t_log, axis=0, keepdims=True)


def stft_loss(x, y, *, fft_size=1024, shift_size=120, win_length=600,
              matmul_dtype=jnp.bfloat16, block_rows=256,
              single_buffer_rhs=False):
    """STFTLoss.forward: returns (sc_loss, mag_loss) scalars.

    matmul_dtype: bf16 is the MXU fast path on v5e/v6e/v7x; pass jnp.float32
        for accuracy-sensitive use (all post-matmul math is f32 either way).
    block_rows:   frames of *each* signal per grid step (MXU M dim is 2x this).
        256 suits v7x (64 MiB VMEM/TC) and v5e; 512 amortizes per-step overhead
        better on v6e (128 MiB VMEM).
    single_buffer_rhs: v7x / VMEM-tight option — single-buffer the constant DFT
        matrix (its index_map never changes) via pipeline_mode=pl.Buffered(1).
    """
    assert fft_size % 2 == 0 and fft_size >= 16
    B, _ = x.shape
    half = fft_size // 2
    n_freq = half + 1

    # Cast to the matmul dtype BEFORE framing so the big framed array is
    # materialized once, directly in bf16 (halves framing HBM traffic).
    xf = _frame_signal(x.astype(matmul_dtype), fft_size, shift_size)
    yf = _frame_signal(y.astype(matmul_dtype), fft_size, shift_size)
    n_frames = xf.shape[1]
    M = B * n_frames
    xf = xf.reshape(M, fft_size)
    yf = yf.reshape(M, fft_size)

    # Row-block selection: R multiple of 16 (bf16 packs 2 rows per sublane);
    # medium M split into ~2 equal blocks; n_blocks >= 2 always so the
    # "parallel" grid axis gives both v7x TensorCores work.
    block_rows = _round_up(max(block_rows, 16), 16)
    if M > 2 * block_rows:
        R = block_rows
    else:
        R = max(16, _round_up(pl.cdiv(M, 2), 16))
    n_blocks = max(2, pl.cdiv(M, R))
    m_pad = n_blocks * R
    if m_pad != M:
        xf = jnp.pad(xf, ((0, m_pad - M), (0, 0)))
        yf = jnp.pad(yf, ((0, m_pad - M), (0, 0)))

    # Per-block interleave: rows [2bR, 2bR+R) are x frames, [2bR+R, 2(b+1)R)
    # are y frames -> single LHS array, single BlockSpec, one matmul per step.
    xy = jnp.concatenate(
        [xf.reshape(n_blocks, R, fft_size), yf.reshape(n_blocks, R, fft_size)],
        axis=1).reshape(n_blocks * 2 * R, fft_size)

    rhs = _windowed_dft_rhs(fft_size, win_length).astype(matmul_dtype)

    rhs_spec_kwargs = {}
    if single_buffer_rhs:
        # Constant index_map -> never re-fetched; one VMEM buffer is enough.
        rhs_spec_kwargs["pipeline_mode"] = pl.Buffered(buffer_count=1)
    # TODO(synk): for fft_size >= 2048, split the RHS over a frequency-column
    # grid axis instead of keeping the full (n_fft, n_fft) block resident.

    partials = pl.pallas_call(
        functools.partial(_stft_loss_kernel, eps=_EPS),
        out_shape=jax.ShapeDtypeStruct((n_blocks, 3, half), jnp.float32),
        grid=(n_blocks,),
        in_specs=[
            pl.BlockSpec((2 * R, fft_size), lambda b: (b, 0)),
            pl.BlockSpec((fft_size, fft_size), lambda b: (0, 0),
                         **rhs_spec_kwargs),
        ],
        out_specs=pl.BlockSpec((1, 3, half), lambda b: (b, 0, 0)),
        compiler_params=pltpu.CompilerParams(
            dimension_semantics=("parallel",),
            vmem_limit_bytes=64 * 1024 * 1024),
    )(xy, rhs)

    n_pad_rows = m_pad - M
    s_num = jnp.sum(partials[:, 0, :])
    s_den = jnp.sum(partials[:, 1, :]) - n_pad_rows * (half + 1) * _EPS
    s_log = jnp.sum(partials[:, 2, :])
    sc_loss = jnp.sqrt(s_num) / jnp.sqrt(s_den)
    mag_loss = 0.5 * s_log / (M * n_freq)
    return sc_loss, mag_loss


# ---------------------------------------------------------------------------
# Pure-JAX f32 reference (highest-precision matmuls) for the sanity check.
# ---------------------------------------------------------------------------
def _stft_loss_ref(x, y, *, fft_size, shift_size, win_length):
    win = _padded_window(fft_size, win_length)
    n = jnp.arange(fft_size, dtype=jnp.float32)[:, None]
    k = jnp.arange(fft_size // 2 + 1, dtype=jnp.float32)[None, :]
    ang = 2.0 * jnp.pi * n * k / fft_size
    cos_m, sin_m = jnp.cos(ang), jnp.sin(ang)

    def mag(sig):
        fr = _frame_signal(sig, fft_size, shift_size) * win[None, None, :]
        r = jnp.einsum("bfn,nk->bfk", fr, cos_m, precision=lax.Precision.HIGHEST)
        i = jnp.einsum("bfn,nk->bfk", fr, sin_m, precision=lax.Precision.HIGHEST)
        return jnp.sqrt(jnp.maximum(r * r + i * i, 1e-7))

    xm, ym = mag(x), mag(y)
    sc = jnp.sqrt(jnp.sum((ym - xm) ** 2)) / jnp.sqrt(jnp.sum(ym ** 2))
    mg = jnp.mean(jnp.abs(jnp.log(ym) - jnp.log(xm)))
    return sc, mg


if __name__ == "__main__":
    fft_size, shift_size, win_length = 256, 64, 128
    B, T = 2, 512

    key = jax.random.PRNGKey(0)
    kx, ky = jax.random.split(key)
    x = jax.random.normal(kx, (B, T), dtype=jnp.float32)
    y = jax.random.normal(ky, (B, T), dtype=jnp.float32)

    sc_loss, mag_loss = stft_loss(
        x, y, fft_size=fft_size, shift_size=shift_size, win_length=win_length)
    jax.block_until_ready((sc_loss, mag_loss))

    sc_ref, mag_ref = _stft_loss_ref(
        x, y, fft_size=fft_size, shift_size=shift_size, win_length=win_length)

    # Kernel uses bf16 MXU inputs (perf default for v5e/v6e/v7x), so compare
    # against the f32 reference with a correspondingly loosened tolerance.
    # (Pass matmul_dtype=jnp.float32 for accuracy-sensitive use.)
    assert jnp.allclose(sc_loss, sc_ref, rtol=2e-2, atol=2e-3), (sc_loss, sc_ref)
    assert jnp.allclose(mag_loss, mag_ref, rtol=2e-2, atol=2e-3), (mag_loss, mag_ref)

    print("KERNEL_OK")
</pallas_src>

<mosaic_0001>
module attributes {stable_mosaic.version = 11 : i64} {
  func.func @_stft_loss_kernel(%arg0: i32, %arg1: memref<32x256xbf16, #tpu.memory_space<vmem>>, %arg2: memref<256x256xbf16, #tpu.memory_space<vmem>>, %arg3: memref<1x3x128xf32, #tpu.memory_space<vmem>>) attributes {dimension_semantics = [#tpu.dimension_semantics<parallel>], iteration_bounds = array<i64: 2>, scalar_prefetch = 0 : i64, scratch_operands = 0 : i64, tpu.core_type = #tpu.core_type<tc>, window_params = [{transform_indices = @transform_0, window_bounds = array<i64: 32, 256>}, {pipeline_mode = #tpu.pipeline_mode<synchronous>, transform_indices = @transform_1, window_bounds = array<i64: 256, 256>}, {transform_indices = @transform_2, window_bounds = array<i64: 1, 3, 128>}]} {
    %c0 = arith.constant 0 : index
    %c0_0 = arith.constant 0 : index
    %0 = vector.load %arg1[%c0, %c0_0] : memref<32x256xbf16, #tpu.memory_space<vmem>>, vector<32x256xbf16>
    %c0_1 = arith.constant 0 : index
    %c0_2 = arith.constant 0 : index
    %1 = vector.load %arg2[%c0_1, %c0_2] : memref<256x256xbf16, #tpu.memory_space<vmem>>, vector<256x256xbf16>
    %cst = arith.constant dense<0.000000e+00> : vector<32x256xf32>
    %2 = tpu.matmul %0, %1, %cst {dimension_numbers = #tpu.dot_dimension_numbers<[1], [0], [0], [1], [0, 0, 1, 1], [], []>} : vector<32x256xbf16>, vector<256x256xbf16>, vector<32x256xf32> -> vector<32x256xf32>
    %3 = vector.extract_strided_slice %2 {offsets = [0, 0], sizes = [16, 256], strides = [1, 1]} : vector<32x256xf32> to vector<16x256xf32>
    %4 = vector.extract_strided_slice %2 {offsets = [16, 0], sizes = [16, 256], strides = [1, 1]} : vector<32x256xf32> to vector<16x256xf32>
    %5 = tpu.iota {dimensions = array<i32: 1>} : vector<16x128xi32>
    %c0_i32 = arith.constant 0 : i32
    %6 = vector.broadcast %c0_i32 : i32 to vector<16x128xi32>
    %7 = arith.cmpi eq, %5, %6 : vector<16x128xi32>
    %8 = arith.mulf %3, %3 : vector<16x256xf32>
    %9 = vector.extract_strided_slice %8 {offsets = [0, 128], sizes = [16, 128], strides = [1, 1]} : vector<16x256xf32> to vector<16x128xf32>
    %10 = vector.extract_strided_slice %8 {offsets = [0, 0], sizes = [16, 128], strides = [1, 1]} : vector<16x256xf32> to vector<16x128xf32>
    %cst_3 = arith.constant 0.000000e+00 : f32
    %11 = vector.broadcast %cst_3 : f32 to vector<16x128xf32>
    %12 = arith.select %7, %11, %9 : vector<16x128xi1>, vector<16x128xf32>
    %13 = arith.addf %10, %12 : vector<16x128xf32>
    %cst_4 = arith.constant 1.000000e-07 : f32
    %14 = vector.broadcast %cst_4 : f32 to vector<16x128xf32>
    %15 = arith.maximumf %13, %14 : vector<16x128xf32>
    %16 = vector.extract_strided_slice %8 {offsets = [0, 128], sizes = [16, 1], strides = [1, 1]} : vector<16x256xf32> to vector<16x1xf32>
    %cst_5 = arith.constant 1.000000e-07 : f32
    %17 = vector.broadcast %cst_5 : f32 to vector<16x1xf32>
    %18 = arith.maximumf %16, %17 : vector<16x1xf32>
    %19 = arith.mulf %4, %4 : vector<16x256xf32>
    %20 = vector.extract_strided_slice %19 {offsets = [0, 128], sizes = [16, 128], strides = [1, 1]} : vector<16x256xf32> to vector<16x128xf32>
    %21 = vector.extract_strided_slice %19 {offsets = [0, 0], sizes = [16, 128], strides = [1, 1]} : vector<16x256xf32> to vector<16x128xf32>
    %cst_6 = arith.constant 0.000000e+00 : f32
    %22 = vector.broadcast %cst_6 : f32 to vector<16x128xf32>
    %23 = arith.select %7, %22, %20 : vector<16x128xi1>, vector<16x128xf32>
    %24 = arith.addf %21, %23 : vector<16x128xf32>
    %cst_7 = arith.constant 1.000000e-07 : f32
    %25 = vector.broadcast %cst_7 : f32 to vector<16x128xf32>
    %26 = arith.maximumf %24, %25 : vector<16x128xf32>
    %27 = vector.extract_strided_slice %19 {offsets = [0, 128], sizes = [16, 1], strides = [1, 1]} : vector<16x256xf32> to vector<16x1xf32>
    %cst_8 = arith.constant 1.000000e-07 : f32
    %28 = vector.broadcast %cst_8 : f32 to vector<16x1xf32>
    %29 = arith.maximumf %27, %28 : vector<16x1xf32>
    %30 = math.sqrt %26 : vector<16x128xf32>
    %31 = math.sqrt %15 : vector<16x128xf32>
    %32 = arith.subf %30, %31 : vector<16x128xf32>
    %33 = math.sqrt %29 : vector<16x1xf32>
    %34 = math.sqrt %18 : vector<16x1xf32>
    %35 = arith.subf %33, %34 : vector<16x1xf32>
    %36 = arith.mulf %32, %32 : vector<16x128xf32>
    %37 = arith.mulf %35, %35 : vector<16x1xf32>
    %cst_9 = arith.constant 0.000000e+00 : f32
    %38 = vector.shape_cast %37 : vector<16x1xf32> to vector<16x1xf32>
    %39 = vector.broadcast %38 : vector<16x1xf32> to vector<16x128xf32>
    %40 = vector.broadcast %cst_9 : f32 to vector<16x128xf32>
    %41 = arith.select %7, %39, %40 : vector<16x128xi1>, vector<16x128xf32>
    %42 = arith.addf %36, %41 : vector<16x128xf32>
    %cst_10 = arith.constant 0.000000e+00 : f32
    %43 = vector.shape_cast %29 : vector<16x1xf32> to vector<16x1xf32>
    %44 = vector.broadcast %43 : vector<16x1xf32> to vector<16x128xf32>
    %45 = vector.broadcast %cst_10 : f32 to vector<16x128xf32>
    %46 = arith.select %7, %44, %45 : vector<16x128xi1>, vector<16x128xf32>
    %47 = arith.addf %26, %46 : vector<16x128xf32>
    %48 = math.log %26 : vector<16x128xf32>
    %49 = math.log %15 : vector<16x128xf32>
    %50 = arith.subf %48, %49 : vector<16x128xf32>
    %51 = math.absf %50 : vector<16x128xf32>
    %52 = math.log %29 : vector<16x1xf32>
    %53 = math.log %18 : vector<16x1xf32>
    %54 = arith.subf %52, %53 : vector<16x1xf32>
    %55 = math.absf %54 : vector<16x1xf32>
    %cst_11 = arith.constant 0.000000e+00 : f32
    %56 = vector.shape_cast %55 : vector<16x1xf32> to vector<16x1xf32>
    %57 = vector.broadcast %56 : vector<16x1xf32> to vector<16x128xf32>
    %58 = vector.broadcast %cst_11 : f32 to vector<16x128xf32>
    %59 = arith.select %7, %57, %58 : vector<16x128xi1>, vector<16x128xf32>
    %60 = arith.addf %51, %59 : vector<16x128xf32>
    %cst_12 = arith.constant dense<0.000000e+00> : vector<128xf32>
    %61 = vector.multi_reduction <add>, %42, %cst_12 [0] : vector<16x128xf32> to vector<128xf32>
    %62 = vector.shape_cast %61 : vector<128xf32> to vector<1x128xf32>
    %c0_13 = arith.constant 0 : index
    %c0_14 = arith.constant 0 : index
    %c0_15 = arith.constant 0 : index
    %63 = vector.load %arg3[%c0_13, %c0_14, %c0_15] : memref<1x3x128xf32, #tpu.memory_space<vmem>>, vector<1x1x128xf32>
    %64 = vector.shape_cast %63 : vector<1x1x128xf32> to vector<1x128xf32>
    %65 = vector.shape_cast %62 : vector<1x128xf32> to vector<1x1x128xf32>
    tpu.vector_store %arg3[%c0_13, %c0_14, %c0_15], %65 {strides = array<i32>} : memref<1x3x128xf32, #tpu.memory_space<vmem>>, vector<1x1x128xf32>,
    %cst_16 = arith.constant dense<0.000000e+00> : vector<128xf32>
    %66 = vector.multi_reduction <add>, %47, %cst_16 [0] : vector<16x128xf32> to vector<128xf32>
    %67 = vector.shape_cast %66 : vector<128xf32> to vector<1x128xf32>
    %c0_17 = arith.constant 0 : index
    %c1 = arith.constant 1 : index
    %c0_18 = arith.constant 0 : index
    %68 = vector.load %arg3[%c0_17, %c1, %c0_18] : memref<1x3x128xf32, #tpu.memory_space<vmem>>, vector<1x1x128xf32>
    %69 = vector.shape_cast %68 : vector<1x1x128xf32> to vector<1x128xf32>
    %70 = vector.shape_cast %67 : vector<1x128xf32> to vector<1x1x128xf32>
    tpu.vector_store %arg3[%c0_17, %c1, %c0_18], %70 {strides = array<i32>} : memref<1x3x128xf32, #tpu.memory_space<vmem>>, vector<1x1x128xf32>,
    %cst_19 = arith.constant dense<0.000000e+00> : vector<128xf32>
    %71 = vector.multi_reduction <add>, %60, %cst_19 [0] : vector<16x128xf32> to vector<128xf32>
    %72 = vector.shape_cast %71 : vector<128xf32> to vector<1x128xf32>
    %c0_20 = arith.constant 0 : index
    %c2 = arith.constant 2 : index
    %c0_21 = arith.constant 0 : index
    %73 = vector.load %arg3[%c0_20, %c2, %c0_21] : memref<1x3x128xf32, #tpu.memory_space<vmem>>, vector<1x1x128xf32>
    %74 = vector.shape_cast %73 : vector<1x1x128xf32> to vector<1x128xf32>
    %75 = vector.shape_cast %72 : vector<1x128xf32> to vector<1x1x128xf32>
    tpu.vector_store %arg3[%c0_20, %c2, %c0_21], %75 {strides = array<i32>} : memref<1x3x128xf32, #tpu.memory_space<vmem>>, vector<1x1x128xf32>,
    return
  }
  func.func @transform_0(%arg0: i32) -> (i32, i32) {
    %c0_i32 = arith.constant 0 : i32
    %c0_i32_0 = arith.constant 0 : i32
    return %arg0, %c0_i32 : i32, i32
  }
  func.func @transform_1(%arg0: i32) -> (i32, i32) {
    %c0_i32 = arith.constant 0 : i32
    %c0_i32_0 = arith.constant 0 : i32
    %c0_i32_1 = arith.constant 0 : i32
    return %c0_i32, %c0_i32_0 : i32, i32
  }
  func.func @transform_2(%arg0: i32) -> (i32, i32, i32) {
    %c0_i32 = arith.constant 0 : i32
    %c0_i32_0 = arith.constant 0 : i32
    %c0_i32_1 = arith.constant 0 : i32
    return %arg0, %c0_i32, %c0_i32_0 : i32, i32, i32
  }
}

</mosaic_0001>

<llo_original>
// kernel: tpu_custom_call.1
$region0: #{tpu_custom_call.1}
  #allocation0 [shape = 'u32[]', space=smem, size = 0x4, offset = 0x4, fixed_abs, tag = 'smem constant byte address 0x4 - core index']
  #allocation1 [shape = 'u32[144,128]{1,0:T(1,128)}', space=vmem, size = 0x12000, scoped, tag = 'internal scratch']
  %s0 = inlined_call_operand.hbm [shape: bf16[64,256], index: 0, kind: input, shape index: {}]
  %s1 = inlined_call_operand.hbm [shape: bf16[256,256], index: 1, kind: input, shape index: {}]
  %s2 = inlined_call_operand.hbm [shape: f32[2,3,128], index: 2, kind: output, shape index: {}]
  %s3 = sld [smem:[#allocation0]]
  $region49: #{tpu_custom_call.1} parent=0
    _
  %s5 = ssub.s32 1, %s3
  %s6 = scalar_select 0, %s5, %s3
  $region1: #{tpu_custom_call.1} parent=0
    #allocation2 [shape = 'u8[32768]{0}', space=vmem, size = 0x8000, scoped, tag = 'input window, operand 0']
    #allocation3 [shape = 's32[2]{0}', space=sflag, size = 0x8, scoped, tag = 'scoped memory for tpu_custom_call.1']
    #allocation4 [shape = 's32[2]{0}', space=sflag, size = 0x8, scoped, tag = 'scoped memory for tpu_custom_call.1']
    #allocation5 [shape = 'u8[131072]{0}', space=vmem, size = 0x20000, scoped, tag = 'input window, operand 1, single buffered']
    #allocation6 [shape = 's32[1]{0}', space=sflag, size = 0x4, scoped, tag = 'scoped memory for tpu_custom_call.1']
    #allocation7 [shape = 'u8[4096]{0}', space=vmem, size = 0x1000, scoped, tag = 'output window, operand 0']
    %7 = vsyncpa [#allocation3], 0
    %s8 = scalar_lea.sflag [#allocation3], 1
    %9 = vsyncpa %s8, 0
    %10 = vsyncpa [#allocation6], 0
    %11 = vsyncpa [#allocation4], 0
    %s12 = scalar_lea.sflag [#allocation4], 1
    %13 = vsyncpa %s12, 0
    loop: start=0, step=1, limit=4
    $region2: #{tpu_custom_call.1} parent=1 // loop_pre_header
      _
    $region3: #{tpu_custom_call.1} parent=1 // loop_header
      %s15 = sphi 0, %s19
      %p16 = scmp.ge.s32.totalorder %s15, 4
      %s25 = sphi 0, %s27
      %s28 = sphi 0, %s25
      %s29 = sphi 0, %s28
      %s45 = sphi 0, %s29
      %s49 = sphi 0, %s49
      %s51 = sphi 0, %s49
      %s52 = sphi 0, %s51
      %s66 = sphi 0, %s52
      %s72 = sphi 0, %s74
      %s75 = sphi 0, %s72
      %s76 = sphi 0, %s75
      %s92 = sphi 0, %s76
    $region4: #{tpu_custom_call.1} parent=1 // loop_header_branch
      %18 = sbr.rel (%p16) target = $region8
    $region5: #{tpu_custom_call.1} parent=1 // loop_body
      %s20 = ssub.s32 %s15, 1
      %s21 = ssub.s32 %s15, 2
      %s22 = sadd.s32 %s15, 1
      %s23 = ssub.s32 %s15, %s22
      %p24 = scmp.eq.s32.totalorder %s23, 0
      %s26 = sadd.s32 %s25, 1
      %s27 = scalar_select %p24, %s25, %s26
      %p30 = pneg %p24
      %p31 = scmp.eq.s32.totalorder %s15, 1
      %p32 = por %p30, %p31
      %p33 = scmp.ne.s32.totalorder %s25, %s28
      %p34 = scmp.eq.s32.totalorder %s15, 0
      %p35 = por %p33, %p34
      %p36 = scmp.ne.s32.totalorder %s25, %s28
      %p37 = scmp.eq.s32.totalorder %s20, 1
      %p38 = por %p36, %p37
      %p39 = scmp.ne.s32.totalorder %s28, %s29
      %p40 = scmp.eq.s32.totalorder %s20, 0
      %p41 = por %p39, %p40
      %p42 = scmp.ne.s32.totalorder %s28, %s29
      %p43 = scmp.eq.s32.totalorder %s21, 1
      %p44 = por %p42, %p43
      %p46 = scmp.ne.s32.totalorder %s29, %s45
      %p47 = scmp.eq.s32.totalorder %s21, 0
      %p48 = por %p46, %p47
      %s50 = sadd.s32 %s49, 1
      %p53 = scmp.eq.s32.totalorder %s15, 1
      %p54 = scmp.ne.s32.totalorder %s49, %s51
      %p55 = scmp.eq.s32.totalorder %s15, 0
      %p56 = por %p54, %p55
      %p57 = scmp.ne.s32.totalorder %s49, %s51
      %p58 = scmp.eq.s32.totalorder %s20, 1
      %p59 = por %p57, %p58
      %p60 = scmp.ne.s32.totalorder %s51, %s52
      %p61 = scmp.eq.s32.totalorder %s20, 0
      %p62 = por %p60, %p61
      %p63 = scmp.ne.s32.totalorder %s51, %s52
      %p64 = scmp.eq.s32.totalorder %s21, 1
      %p65 = por %p63, %p64
      %p67 = scmp.ne.s32.totalorder %s52, %s66
      %p68 = scmp.eq.s32.totalorder %s21, 0
      %p69 = por %p67, %p68
      %s70 = ssub.s32 %s15, %s22
      %p71 = scmp.eq.s32.totalorder %s70, 0
      %s73 = sadd.s32 %s72, 1
      %s74 = scalar_select %p71, %s72, %s73
      %p77 = pneg %p71
      %p78 = scmp.eq.s32.totalorder %s15, 1
      %p79 = por %p77, %p78
      %p80 = scmp.ne.s32.totalorder %s72, %s75
      %p81 = scmp.eq.s32.totalorder %s15, 0
      %p82 = por %p80, %p81
      %p83 = scmp.ne.s32.totalorder %s72, %s75
      %p84 = scmp.eq.s32.totalorder %s20, 1
      %p85 = por %p83, %p84
      %p86 = scmp.ne.s32.totalorder %s75, %s76
      %p87 = scmp.eq.s32.totalorder %s20, 0
      %p88 = por %p86, %p87
      %p89 = scmp.ne.s32.totalorder %s75, %s76
      %p90 = scmp.eq.s32.totalorder %s21, 1
      %p91 = por %p89, %p90
      %p93 = scmp.ne.s32.totalorder %s76, %s92
      %p94 = scmp.eq.s32.totalorder %s21, 0
      %p95 = por %p93, %p94
      %p96 = scmp.le.s32.totalorder 1, %s15
      %p97 = scmp.lt.s32.totalorder %s15, 3
      %p98 = pnand %p96, %p97
      %p99 = pneg %p98
      // Predicated region
      $region9: #{tpu_custom_call.1} parent=5 // pred_check
        _
      $region10: #{tpu_custom_call.1} parent=5 // pred_check_branch
        %101 = sbr.rel (%p98) target = $region12
      $region11: #{tpu_custom_call.1} parent=5 // pred_region
        %s102 = ssub.s32 %s15, 1
        // Predicated region
        $region13: #{tpu_custom_call.1} parent=11 // pred_check
          %p103 = pneg %p62
        $region14: #{tpu_custom_call.1} parent=11 // pred_check_branch
          %105 = sbr.rel (%p103) target = $region16
        $region15: #{tpu_custom_call.1} parent=11 // pred_region
          %s107 = ssub.s32 4096, 4096
          %108 = vsyncadd [#allocation6], %s107
          %s109 = sshll.u32 [#allocation5], 4
          %s110 = int_to_ptr.vmem [resolvable:$true] %s109
          %115 = dma.hbm_to_vmem [thread:$0]  %s1, 4096, %s110, [#allocation6], 128, 128, 8
        $region16: #{tpu_custom_call.1} parent=11 // pred_fallthru
          _
      $region12: #{tpu_custom_call.1} parent=5 // pred_fallthru
        _
      %p116 = scmp.lt.s32.totalorder %s15, 2
      // Predicated region
      $region17: #{tpu_custom_call.1} parent=5 // pred_check
        %p117 = pneg %p116
      $region18: #{tpu_custom_call.1} parent=5 // pred_check_branch
        %119 = sbr.rel (%p117) target = $region20
      $region19: #{tpu_custom_call.1} parent=5 // pred_region
        // Predicated region
        $region21: #{tpu_custom_call.1} parent=19 // pred_check
          %p120 = pneg %p35
        $region22: #{tpu_custom_call.1} parent=19 // pred_check_branch
          %122 = sbr.rel (%p120) target = $region24
        $region23: #{tpu_custom_call.1} parent=19 // pred_region
          %s123 = sand.u32 %s25, 1
          %s124 = scalar_lea.sflag [#allocation3], %s123
          %s125 = sand.u32 %s25, 1
          %s126 = smul.addr %s125, 32
          %s127 = scalar_lea.vmem [#allocation2], %s126
          %s128 = smul.u32 4, %s15
          %s130 = ssub.s32 512, 512
          %131 = vsyncadd %s124, %s130
          %s132 = smul.addr %s128, 2
          %s133 = smul.addr %s132, 64
          %s134 = scalar_lea.hbm %s0, %s133
          %s135 = sshll.u32 %s127, 4
          %s136 = int_to_ptr.vmem [resolvable:$true] %s135
          %141 = dma.hbm_to_vmem [thread:$0]  %s134, 512, %s136, %s124, 128, 128, 8
        $region24: #{tpu_custom_call.1} parent=19 // pred_fallthru
          _
      $region20: #{tpu_custom_call.1} parent=5 // pred_fallthru
        _
      %p142 = scmp.le.s32.totalorder 1, %s15
      %p143 = scmp.lt.s32.totalorder %s15, 3
      %p144 = pnand %p142, %p143
      %p145 = pneg %p144
      // Predicated region
      $region25: #{tpu_custom_call.1} parent=5 // pred_check
        _
      $region26: #{tpu_custom_call.1} parent=5 // pred_check_branch
        %147 = sbr.rel (%p144) target = $region28
      $region27: #{tpu_custom_call.1} parent=5 // pred_region
        %s148 = ssub.s32 %s15, 1
        %s149 = sand.u32 %s28, 1
        %s150 = scalar_lea.sflag [#allocation3], %s149
        %s151 = sand.u32 %s28, 1
        %s152 = smul.addr %s151, 32
        %s153 = scalar_lea.vmem [#allocation2], %s152
        // Predicated region
        $region29: #{tpu_custom_call.1} parent=27 // pred_check
          %p154 = pneg %p41
        $region30: #{tpu_custom_call.1} parent=27 // pred_check_branch
          %156 = sbr.rel (%p154) target = $region32
        $region31: #{tpu_custom_call.1} parent=27 // pred_region
          %157 = dma.done %s150, 512
        $region32: #{tpu_custom_call.1} parent=27 // pred_fallthru
          _
        // Predicated region
        $region33: #{tpu_custom_call.1} parent=27 // pred_check
          %p158 = pneg %p62
        $region34: #{tpu_custom_call.1} parent=27 // pred_check_branch
          %160 = sbr.rel (%p158) target = $region36
        $region35: #{tpu_custom_call.1} parent=27 // pred_region
          %161 = dma.done [#allocation6], 4096
        $region36: #{tpu_custom_call.1} parent=27 // pred_fallthru
          _
        %s162 = sand.u32 %s28, 1
        %s163 = scalar_lea.sflag [#allocation3], %s162
        %s164 = sand.u32 %s28, 1
        %s165 = smul.addr %s164, 32
        %s166 = scalar_lea.vmem [#allocation2], %s165
        %p167 = pneg %p41
        %p168 = pneg %p38
        %p169 = pneg %p62
        %p170 = pneg %p59
        %p171 = pneg %p88
        %p172 = pneg %p85
        %s173 = sand.u32 %s75, 1
        %s174 = scalar_lea.sflag [#allocation4], %s173
        %s175 = sand.u32 %s75, 1
        %s176 = smul.addr %s175, 4
        %s177 = scalar_lea.vmem [#allocation7], %s176
        %s178 = smul.u32 4, %s20
        %v179 = vld [vmem:[%s153] sm:$0xff]
        %v180 = vld [vmem:[%s153 + $0x8] sm:$0xff]
        %v181 = vld [vmem:[%s153 + $0x10] sm:$0xff]
        %v182 = vld [vmem:[%s153 + $0x18] sm:$0xff]
        %v183 = vld [vmem:[#allocation5] sm:$0xff]
        %v184 = vld [vmem:[#allocation5 + $0x8] sm:$0xff]
        %v185 = vld [vmem:[#allocation5 + $0x10] sm:$0xff]
        %v186 = vld [vmem:[#allocation5 + $0x18] sm:$0xff]
        %v187 = vld [vmem:[#allocation5 + $0x20] sm:$0xff]
        %v188 = vld [vmem:[#allocation5 + $0x28] sm:$0xff]
        %v189 = vld [vmem:[#allocation5 + $0x30] sm:$0xff]
        %v190 = vld [vmem:[#allocation5 + $0x38] sm:$0xff]
        %v191 = vld [vmem:[#allocation5 + $0x40] sm:$0xff]
        %v192 = vld [vmem:[#allocation5 + $0x48] sm:$0xff]
        %v193 = vld [vmem:[#allocation5 + $0x50] sm:$0xff]
        %v194 = vld [vmem:[#allocation5 + $0x58] sm:$0xff]
        %v195 = vld [vmem:[#allocation5 + $0x60] sm:$0xff]
        %v196 = vld [vmem:[#allocation5 + $0x68] sm:$0xff]
        %v197 = vld [vmem:[#allocation5 + $0x70] sm:$0xff]
        %v198 = vld [vmem:[#allocation5 + $0x78] sm:$0xff]
        %v199 = vld [vmem:[#allocation5 + $0x80] sm:$0xff]
        %v200 = vld [vmem:[#allocation5 + $0x88] sm:$0xff]
        %v201 = vld [vmem:[#allocation5 + $0x90] sm:$0xff]
        %v202 = vld [vmem:[#allocation5 + $0x98] sm:$0xff]
        %v203 = vld [vmem:[#allocation5 + $0xa0] sm:$0xff]
        %v204 = vld [vmem:[#allocation5 + $0xa8] sm:$0xff]
        %v205 = vld [vmem:[#allocation5 + $0xb0] sm:$0xff]
        %v206 = vld [vmem:[#allocation5 + $0xb8] sm:$0xff]
        %v207 = vld [vmem:[#allocation5 + $0xc0] sm:$0xff]
        %v208 = vld [vmem:[#allocation5 + $0xc8] sm:$0xff]
        %v209 = vld [vmem:[#allocation5 + $0xd0] sm:$0xff]
        %v210 = vld [vmem:[#allocation5 + $0xd8] sm:$0xff]
        %v211 = vld [vmem:[#allocation5 + $0xe0] sm:$0xff]
        %v212 = vld [vmem:[#allocation5 + $0xe8] sm:$0xff]
        %v213 = vld [vmem:[#allocation5 + $0xf0] sm:$0xff]
        %v214 = vld [vmem:[#allocation5 + $0xf8] sm:$0xff]
        %v219 = vunpack.c.l.b16 %v179
        %v220 = vunpack.c.h.b16 %v179
        %v221 = vunpack.c.l.b16 %v180
        %v222 = vunpack.c.h.b16 %v180
        %v223 = vunpack.c.l.b16 %v181
        %v224 = vunpack.c.h.b16 %v181
        %v225 = vunpack.c.l.b16 %v182
        %v226 = vunpack.c.h.b16 %v182
        %v227 = vpack.c.b16 %v221, %v219
        %v228 = vpack.c.b16 %v222, %v220
        %v229 = vpack.c.b16 %v225, %v223
        %v230 = vpack.c.b16 %v226, %v224
        %v267 = vunpack.c.l.b16 %v183
        %v268 = vunpack.c.h.b16 %v183
        %v269 = vunpack.c.l.b16 %v184
        %v270 = vunpack.c.h.b16 %v184
        %v271 = vunpack.c.l.b16 %v185
        %v272 = vunpack.c.h.b16 %v185
        %v273 = vunpack.c.l.b16 %v186
        %v274 = vunpack.c.h.b16 %v186
        %v275 = vunpack.c.l.b16 %v187
        %v276 = vunpack.c.h.b16 %v187
        %v277 = vunpack.c.l.b16 %v188
        %v278 = vunpack.c.h.b16 %v188
        %v279 = vunpack.c.l.b16 %v189
        %v280 = vunpack.c.h.b16 %v189
        %v281 = vunpack.c.l.b16 %v190
        %v282 = vunpack.c.h.b16 %v190
        %v283 = vunpack.c.l.b16 %v191
        %v284 = vunpack.c.h.b16 %v191
        %v285 = vunpack.c.l.b16 %v192
        %v286 = vunpack.c.h.b16 %v192
        %v287 = vunpack.c.l.b16 %v193
        %v288 = vunpack.c.h.b16 %v193
        %v289 = vunpack.c.l.b16 %v194
        %v290 = vunpack.c.h.b16 %v194
        %v291 = vunpack.c.l.b16 %v195
        %v292 = vunpack.c.h.b16 %v195
        %v293 = vunpack.c.l.b16 %v196
        %v294 = vunpack.c.h.b16 %v196
        %v295 = vunpack.c.l.b16 %v197
        %v296 = vunpack.c.h.b16 %v197
        %v297 = vunpack.c.l.b16 %v198
        %v298 = vunpack.c.h.b16 %v198
        %v299 = vunpack.c.l.b16 %v199
        %v300 = vunpack.c.h.b16 %v199
        %v301 = vunpack.c.l.b16 %v200
        %v302 = vunpack.c.h.b16 %v200
        %v303 = vunpack.c.l.b16 %v201
        %v304 = vunpack.c.h.b16 %v201
        %v305 = vunpack.c.l.b16 %v202
        %v306 = vunpack.c.h.b16 %v202
        %v307 = vunpack.c.l.b16 %v203
        %v308 = vunpack.c.h.b16 %v203
        %v309 = vunpack.c.l.b16 %v204
        %v310 = vunpack.c.h.b16 %v204
        %v311 = vunpack.c.l.b16 %v205
        %v312 = vunpack.c.h.b16 %v205
        %v313 = vunpack.c.l.b16 %v206
        %v314 = vunpack.c.h.b16 %v206
        %v315 = vunpack.c.l.b16 %v207
        %v316 = vunpack.c.h.b16 %v207
        %v317 = vunpack.c.l.b16 %v208
        %v318 = vunpack.c.h.b16 %v208
        %v319 = vunpack.c.l.b16 %v209
        %v320 = vunpack.c.h.b16 %v209
        %v321 = vunpack.c.l.b16 %v210
        %v322 = vunpack.c.h.b16 %v210
        %v323 = vunpack.c.l.b16 %v211
        %v324 = vunpack.c.h.b16 %v211
        %v325 = vunpack.c.l.b16 %v212
        %v326 = vunpack.c.h.b16 %v212
        %v327 = vunpack.c.l.b16 %v213
        %v328 = vunpack.c.h.b16 %v213
        %v329 = vunpack.c.l.b16 %v214
        %v330 = vunpack.c.h.b16 %v214
        %v331 = vpack.c.b16 %v269, %v267
        %v332 = vpack.c.b16 %v270, %v268
        %v333 = vpack.c.b16 %v273, %v271
        %v334 = vpack.c.b16 %v274, %v272
        %v335 = vpack.c.b16 %v277, %v275
        %v336 = vpack.c.b16 %v278, %v276
        %v337 = vpack.c.b16 %v281, %v279
        %v338 = vpack.c.b16 %v282, %v280
        %v339 = vpack.c.b16 %v285, %v283
        %v340 = vpack.c.b16 %v286, %v284
        %v341 = vpack.c.b16 %v289, %v287
        %v342 = vpack.c.b16 %v290, %v288
        %v343 = vpack.c.b16 %v293, %v291
        %v344 = vpack.c.b16 %v294, %v292
        %v345 = vpack.c.b16 %v297, %v295
        %v346 = vpack.c.b16 %v298, %v296
        %v347 = vpack.c.b16 %v301, %v299
        %v348 = vpack.c.b16 %v302, %v300
        %v349 = vpack.c.b16 %v305, %v303
        %v350 = vpack.c.b16 %v306, %v304
        %v351 = vpack.c.b16 %v309, %v307
        %v352 = vpack.c.b16 %v310, %v308
        %v353 = vpack.c.b16 %v313, %v311
        %v354 = vpack.c.b16 %v314, %v312
        %v355 = vpack.c.b16 %v317, %v315
        %v356 = vpack.c.b16 %v318, %v316
        %v357 = vpack.c.b16 %v321, %v319
        %v358 = vpack.c.b16 %v322, %v320
        %v359 = vpack.c.b16 %v325, %v323
        %v360 = vpack.c.b16 %v326, %v324
        %v361 = vpack.c.b16 %v329, %v327
        %v362 = vpack.c.b16 %v330, %v328
        %395 = vmatprep.subr.bf16.mxu0 %v332
        %396 = vmatpush1.bf16.msra.mxu0 %v331
        %397 = vmatprep.subr.bf16.mxu0 %v334
        %398 = vmatpush1.bf16.msra.mxu0 %v333
        %399 = vmatprep.subr.bf16.mxu0 %v336
        %400 = vmatpush1.bf16.msra.mxu0 %v335
        %401 = vmatprep.subr.bf16.mxu0 %v338
        %402 = vmatpush1.bf16.msra.mxu0 %v337
        %403 = vmatprep.subr.bf16.mxu0 %v340
        %404 = vmatpush1.bf16.msra.mxu0 %v339
        %405 = vmatprep.subr.bf16.mxu0 %v342
        %406 = vmatpush1.bf16.msra.mxu0 %v341
        %407 = vmatprep.subr.bf16.mxu0 %v344
        %408 = vmatpush1.bf16.msra.mxu0 %v343
        %409 = vmatprep.subr.bf16.mxu0 %v346
        %410 = vmatpush1.bf16.msra.mxu0 %v345
        %411 = vmatprep.subr.bf16.mxu0 %v348
        %412 = vmatpush1.bf16.msra.mxu0 %v347
        %413 = vmatprep.subr.bf16.mxu0 %v350
        %414 = vmatpush1.bf16.msra.mxu0 %v349
        %415 = vmatprep.subr.bf16.mxu0 %v352
        %416 = vmatpush1.bf16.msra.mxu0 %v351
        %417 = vmatprep.subr.bf16.mxu0 %v354
        %418 = vmatpush1.bf16.msra.mxu0 %v353
        %419 = vmatprep.subr.bf16.mxu0 %v356
        %420 = vmatpush1.bf16.msra.mxu0 %v355
        %421 = vmatprep.subr.bf16.mxu0 %v358
        %422 = vmatpush1.bf16.msra.mxu0 %v357
        %423 = vmatprep.subr.bf16.mxu0 %v360
        %424 = vmatpush1.bf16.msra.mxu0 %v359
        %425 = vmatprep.subr.bf16.mxu0 %v362
        %426 = vmatpush1.bf16.msra.mxu0 %v361
        %427 = vmatprep.mubr.bf16.mxu0 %v228
        %428 = vmatmul.mubr.bf16.gmra.mrb[0].mxu0 %v227
        %v429 = vpop.f32.mrb[0].mxu0
        %v430 = vadd.f32 0.0, %v429
        %v431 = vpop.f32.mrb[0].mxu0
        %v432 = vadd.f32 0.0, %v431
        %v433 = vpop.f32.mrb[0].mxu0
        %v434 = vadd.f32 0.0, %v433
        %v435 = vpop.f32.mrb[0].mxu0
        %v436 = vadd.f32 0.0, %v435
        %437 = vmatprep.mubr.bf16.mxu0 %v230
        %438 = vmatmul.mubr.bf16.gmra.mrb[0].mxu0 %v229
        %v439 = vpop.f32.mrb[0].mxu0
        %v440 = vadd.f32 0.0, %v439
        %v441 = vpop.f32.mrb[0].mxu0
        %v442 = vadd.f32 0.0, %v441
        %v443 = vpop.f32.mrb[0].mxu0
        %v444 = vadd.f32 0.0, %v443
        %v445 = vpop.f32.mrb[0].mxu0
        %v446 = vadd.f32 0.0, %v445
        %447 = vdwg.mxu0
        %v448 = vlaneseq
        %v449 = vand.u32 %v448, 127
        %vm450 = vcmp.eq.s32.totalorder %v449, 0
        %v451 = vmul.f32 %v430, %v430
        %v452 = vmul.f32 %v432, %v432
        %v453 = vmul.f32 %v434, %v434
        %v454 = vmul.f32 %v436, %v436
        %v455 = vsel %vm450, 0.0, %v452
        %v456 = vsel %vm450, 0.0, %v454
        %v457 = vadd.f32 %v451, %v455
        %v458 = vadd.f32 %v453, %v456
        %v459 = vmax.f32 %v457, 1e-07
        %v460 = vmax.f32 %v458, 1e-07
        %v461 = vmax.f32 %v452, 1e-07
        %v462 = vmax.f32 %v454, 1e-07
        %v463 = vmul.f32 %v440, %v440
        %v464 = vmul.f32 %v442, %v442
        %v465 = vmul.f32 %v444, %v444
        %v466 = vmul.f32 %v446, %v446
        %v467 = vsel %vm450, 0.0, %v464
        %v468 = vsel %vm450, 0.0, %v466
        %v469 = vadd.f32 %v463, %v467
        %v470 = vadd.f32 %v465, %v468
        %v471 = vmax.f32 %v469, 1e-07
        %v472 = vmax.f32 %v470, 1e-07
        %v473 = vmax.f32 %v464, 1e-07
        %v474 = vmax.f32 %v466, 1e-07
        %v475 = vrsqrt.pop %v471
        %v476 = vmul.f32 %v471, %v475
        %vm477 = vcmp.eq.f32.partialorder %v471, inf
        %v478 = vsel %vm477, %v471, %v476
        %vm479 = vcmp.eq.f32.partialorder %v471, 0.0
        %v480 = vand.u32 %v471, 2147483648
        %v481 = vsel %vm479, %v480, %v478
        %v482 = vrsqrt.pop %v472
        %v483 = vmul.f32 %v472, %v482
        %vm484 = vcmp.eq.f32.partialorder %v472, inf
        %v485 = vsel %vm484, %v472, %v483
        %vm486 = vcmp.eq.f32.partialorder %v472, 0.0
        %v487 = vand.u32 %v472, 2147483648
        %v488 = vsel %vm486, %v487, %v485
        %v489 = vrsqrt.pop %v459
        %v490 = vmul.f32 %v459, %v489
        %vm491 = vcmp.eq.f32.partialorder %v459, inf
        %v492 = vsel %vm491, %v459, %v490
        %vm493 = vcmp.eq.f32.partialorder %v459, 0.0
        %v494 = vand.u32 %v459, 2147483648
        %v495 = vsel %vm493, %v494, %v492
        %v496 = vrsqrt.pop %v460
        %v497 = vmul.f32 %v460, %v496
        %vm498 = vcmp.eq.f32.partialorder %v460, inf
        %v499 = vsel %vm498, %v460, %v497
        %vm500 = vcmp.eq.f32.partialorder %v460, 0.0
        %v501 = vand.u32 %v460, 2147483648
        %v502 = vsel %vm500, %v501, %v499
        %v503 = vsub.f32 %v481, %v495
        %v504 = vsub.f32 %v488, %v502
        %v505 = vrsqrt.pop %v473
        %v506 = vmul.f32 %v473, %v505
        %vm507 = vcmp.eq.f32.partialorder %v473, inf
        %v508 = vsel %vm507, %v473, %v506
        %vm509 = vcmp.eq.f32.partialorder %v473, 0.0
        %v510 = vand.u32 %v473, 2147483648
        %v511 = vsel %vm509, %v510, %v508
        %v512 = vrsqrt.pop %v474
        %v513 = vmul.f32 %v474, %v512
        %vm514 = vcmp.eq.f32.partialorder %v474, inf
        %v515 = vsel %vm514, %v474, %v513
        %vm516 = vcmp.eq.f32.partialorder %v474, 0.0
        %v517 = vand.u32 %v474, 2147483648
        %v518 = vsel %vm516, %v517, %v515
        %v519 = vrsqrt.pop %v461
        %v520 = vmul.f32 %v461, %v519
        %vm521 = vcmp.eq.f32.partialorder %v461, inf
        %v522 = vsel %vm521, %v461, %v520
        %vm523 = vcmp.eq.f32.partialorder %v461, 0.0
        %v524 = vand.u32 %v461, 2147483648
        %v525 = vsel %vm523, %v524, %v522
        %v526 = vrsqrt.pop %v462
        %v527 = vmul.f32 %v462, %v526
        %vm528 = vcmp.eq.f32.partialorder %v462, inf
        %v529 = vsel %vm528, %v462, %v527
        %vm530 = vcmp.eq.f32.partialorder %v462, 0.0
        %v531 = vand.u32 %v462, 2147483648
        %v532 = vsel %vm530, %v531, %v529
        %v533 = vsub.f32 %v511, %v525
        %v534 = vsub.f32 %v518, %v532
        %v535 = vmul.f32 %v503, %v503
        %v536 = vmul.f32 %v504, %v504
        %v537 = vmul.f32 %v533, %v533
        %v538 = vmul.f32 %v534, %v534
        %540 = vset.pattern.permute.xlu0 0
        %541 = vperm.xlu0 %540, %v537
        %v542 = vpop.permute.xlu0 %541
        %545 = vset.pattern.permute.xlu0 0
        %546 = vperm.xlu0 %545, %v538
        %v547 = vpop.permute.xlu0 %546
        %v549 = vsel %vm450, %v542, 0.0
        %v550 = vsel %vm450, %v547, 0.0
        %v551 = vadd.f32 %v535, %v549
        %v552 = vadd.f32 %v536, %v550
        %554 = vset.pattern.permute.xlu0 0
        %555 = vperm.xlu0 %554, %v473
        %v556 = vpop.permute.xlu0 %555
        %559 = vset.pattern.permute.xlu0 0
        %560 = vperm.xlu0 %559, %v474
        %v561 = vpop.permute.xlu0 %560
        %v563 = vsel %vm450, %v556, 0.0
        %v564 = vsel %vm450, %v561, 0.0
        %v565 = vadd.f32 %v471, %v563
        %v566 = vadd.f32 %v472, %v564
        %v567 = vlog2.pop %v471
        %v568 = vmul.f32 %v567, 0.6931472
        %v569 = vlog2.pop %v472
        %v570 = vmul.f32 %v569, 0.6931472
        %v571 = vlog2.pop %v459
        %v572 = vmul.f32 %v571, 0.6931472
        %v573 = vlog2.pop %v460
        %v574 = vmul.f32 %v573, 0.6931472
        %v575 = vsub.f32 %v568, %v572
        %v576 = vsub.f32 %v570, %v574
        %v577 = vand.u32 2147483647, %v575
        %v578 = vand.u32 2147483647, %v576
        %v579 = vlog2.pop %v473
        %v580 = vmul.f32 %v579, 0.6931472
        %v581 = vlog2.pop %v474
        %v582 = vmul.f32 %v581, 0.6931472
        %v583 = vlog2.pop %v461
        %v584 = vmul.f32 %v583, 0.6931472
        %v585 = vlog2.pop %v462
        %v586 = vmul.f32 %v585, 0.6931472
        %v587 = vsub.f32 %v580, %v584
        %v588 = vsub.f32 %v582, %v586
        %v589 = vand.u32 2147483647, %v587
        %v590 = vand.u32 2147483647, %v588
        %592 = vset.pattern.permute.xlu0 0
        %593 = vperm.xlu0 %592, %v589
        %v594 = vpop.permute.xlu0 %593
        %597 = vset.pattern.permute.xlu0 0
        %598 = vperm.xlu0 %597, %v590
        %v599 = vpop.permute.xlu0 %598
        %v601 = vsel %vm450, %v594, 0.0
        %v602 = vsel %vm450, %v599, 0.0
        %v603 = vadd.f32 %v577, %v601
        %v604 = vadd.f32 %v578, %v602
        %v605 = vadd.f32 %v551, %v552
        %v606 = vrot.slane %v605, 4
        %v607 = vadd.f32 %v605, %v606
        %v608 = vrot.slane %v607, 2
        %v609 = vadd.f32 %v607, %v608
        %v610 = vrot.slane %v609, 1
        %v611 = vadd.f32 %v609, %v610
        %612 = vst [vmem:[%s177] sm:$0x1] %v611
        %v613 = vadd.f32 %v565, %v566
        %v614 = vrot.slane %v613, 4
        %v615 = vadd.f32 %v613, %v614
        %v616 = vrot.slane %v615, 2
        %v617 = vadd.f32 %v615, %v616
        %v618 = vrot.slane %v617, 1
        %v619 = vadd.f32 %v617, %v618
        %620 = vst [vmem:[%s177 + $0x1] sm:$0x1] %v619
        %v621 = vadd.f32 %v603, %v604
        %v622 = vrot.slane %v621, 4
        %v623 = vadd.f32 %v621, %v622
        %v624 = vrot.slane %v623, 2
        %v625 = vadd.f32 %v623, %v624
        %v626 = vrot.slane %v625, 1
        %v627 = vadd.f32 %v625, %v626
        %628 = vst [vmem:[%s177 + $0x2] sm:$0x1] %v627
        %s629 = sand.u32 %s75, 1
        %s630 = scalar_lea.sflag [#allocation4], %s629
        %s631 = sand.u32 %s75, 1
        %s632 = smul.addr %s631, 4
        %s633 = scalar_lea.vmem [#allocation7], %s632
        // Predicated region
        $region37: #{tpu_custom_call.1} parent=27 // pred_check
          %p634 = pneg %p85
        $region38: #{tpu_custom_call.1} parent=27 // pred_check_branch
          %636 = sbr.rel (%p634) target = $region40
        $region39: #{tpu_custom_call.1} parent=27 // pred_region
          %s638 = ssub.s32 64, 64
          %639 = vsyncadd %s630, %s638
          %s640 = smul.addr %s20, 64
          %s641 = scalar_lea.hbm %s2, %s640
          %s643 = sshll.u32 %s633, 4
          %s644 = int_to_ptr.vmem [resolvable:$true] %s643
          %646 = dma.vmem_to_hbm [thread:$0]  %s644, 64, %s641, %s630
        $region40: #{tpu_custom_call.1} parent=27 // pred_fallthru
          _
      $region28: #{tpu_custom_call.1} parent=5 // pred_fallthru
        _
      %p647 = scmp.le.s32.totalorder 2, %s15
      // Predicated region
      $region41: #{tpu_custom_call.1} parent=5 // pred_check
        %p648 = pneg %p647
      $region42: #{tpu_custom_call.1} parent=5 // pred_check_branch
        %650 = sbr.rel (%p648) target = $region44
      $region43: #{tpu_custom_call.1} parent=5 // pred_region
        %s651 = ssub.s32 %s15, 2
        // Predicated region
        $region45: #{tpu_custom_call.1} parent=43 // pred_check
          %p652 = pneg %p91
        $region46: #{tpu_custom_call.1} parent=43 // pred_check_branch
          %654 = sbr.rel (%p652) target = $region48
        $region47: #{tpu_custom_call.1} parent=43 // pred_region
          %s655 = sand.u32 %s76, 1
          %s656 = scalar_lea.sflag [#allocation4], %s655
          %s657 = sand.u32 %s76, 1
          %s658 = smul.addr %s657, 4
          %s659 = scalar_lea.vmem [#allocation7], %s658
          %660 = dma.done %s656, 64
        $region48: #{tpu_custom_call.1} parent=43 // pred_fallthru
          _
      $region44: #{tpu_custom_call.1} parent=5 // pred_fallthru
        _
    $region6: #{tpu_custom_call.1} parent=1 // loop_footer
      %s19 = sadd.s32 1, %s15
    $region7: #{tpu_custom_call.1} parent=1 // loop_footer_branch
      %14 = sbr.rel target = $region3
    $region8: #{tpu_custom_call.1} parent=1 // loop_exit
      _
    %661 = vsyncpa [#allocation3], 1
    %s662 = scalar_lea.sflag [#allocation3], 1
    %663 = vsyncpa %s662, 1
    %664 = vsyncpa [#allocation6], 1
    %665 = vsyncpa [#allocation4], 1
    %s666 = scalar_lea.sflag [#allocation4], 1
    %667 = vsyncpa %s666, 1

</llo_original>
